<compile_context>
chip_gen: v7x
topology: tpu7x:2x2x1
jax: 0.10.0
libtpu: 0.0.40
codegen_flags: <defaults>
</compile_context>

<pallas_src>
import functools
import math

import jax
import jax.numpy as jnp
from jax.experimental import pallas as pl
from jax.experimental.pallas import tpu as pltpu


_LANE = 128
_TARGET_F32_BLOCK_ELEMS = (1 * 1024 * 1024) // 4   # ~1 MiB of f32 per block


def _round_up(v, k):
    return ((v + k - 1) // k) * k


def _wls_kernel_sublane(w_ref, x_ref, o_ref):
    """Softnorm over the sublane axis of a (TB, C, TM) block; w is (C, 1)."""
    x = x_ref[...].astype(jnp.float32)                         # (TB, C, TM)
    w = w_ref[...].astype(jnp.float32)                         # (C, 1) -> bcast lanes/batch
    c = x.shape[1]
    offset = jnp.sum(x, axis=1, keepdims=True) * (1.0 / c)     # (TB, 1, TM) XLU sublane reduce
    clamped = jnp.clip(x + w - offset, 0.0, 1.0)               # VPU
    sumsq = jnp.sum(clamped * clamped, axis=1, keepdims=True)  # (TB, 1, TM)
    inv_norm = jax.lax.rsqrt(sumsq)                            # EUP, only 1/C of elems
    o_ref[...] = (clamped * inv_norm).astype(o_ref.dtype)


def _wls_kernel_lane(w_ref, x_ref, o_ref):
    """Softnorm over the lane axis of a (TB, C) block; w is (1, C)."""
    x = x_ref[...].astype(jnp.float32)                         # (TB, C)
    w = w_ref[...].astype(jnp.float32)                         # (1, C)
    c = x.shape[-1]
    offset = jnp.sum(x, axis=-1, keepdims=True) * (1.0 / c)    # (TB, 1) cross-lane reduce
    clamped = jnp.clip(x + w - offset, 0.0, 1.0)
    sumsq = jnp.sum(clamped * clamped, axis=-1, keepdims=True)
    inv_norm = jax.lax.rsqrt(sumsq)
    o_ref[...] = (clamped * inv_norm).astype(o_ref.dtype)


def _pick_tiles_sublane(b, c, m):
    """(TB, TM) for the (B, C, M) layout: lane-dense TM, then TB to ~1 MiB f32."""
    target = _TARGET_F32_BLOCK_ELEMS
    if m <= _LANE:
        tm = m                                                  # full lane extent (legal)
    else:
        tm_cap = max(_LANE, (target // max(c, 1)) // _LANE * _LANE)
        tm = min(_round_up(m, _LANE), tm_cap, 8192)
    tb = max(1, target // (max(c, 1) * tm))
    tb = min(tb, b)
    return tb, tm


def _pick_tile_lane(b, c):
    """TB for the (B, C) layout: multiple of 8 sublanes, ~1 MiB f32 per block."""
    target = _TARGET_F32_BLOCK_ELEMS
    tb = max(8, (target // max(c, 1)) // 8 * 8)
    if tb >= b:
        return b                                                # full extent (always legal)
    return tb


@functools.partial(jax.jit, static_argnames=("dim",))
def weighted_linear_softnorm_pallas(x, weights=None, *, dim=1):
    """Weighted linear softnorm along `dim` of `x` using a Pallas TPU kernel."""
    ndim = x.ndim
    dim = dim % ndim
    c = x.shape[dim]

    if weights is None:
        w_vals = jnp.full((c,), 1.0 / c, dtype=jnp.float32)
    else:
        w_vals = jnp.asarray(weights, dtype=jnp.float32).reshape(c)

    lead = x.shape[:dim]
    trail = x.shape[dim + 1:]
    b = math.prod(lead) if lead else 1
    m = math.prod(trail) if trail else 1

    itemsize = jnp.dtype(x.dtype).itemsize
    cost = pl.CostEstimate(
        flops=6 * x.size,
        transcendentals=b * m,                  # one rsqrt per reduced column
        bytes_accessed=2 * x.size * itemsize,   # read x + write out (mem-bound op)
    )

    if m == 1:
        # Softnorm over the innermost dim: lane-axis reduction on a (B, C) view.
        x2 = x.reshape(b, c)
        w2 = w_vals.reshape(1, c)
        tb = _pick_tile_lane(b, c)
        out = pl.pallas_call(
            _wls_kernel_lane,
            out_shape=jax.ShapeDtypeStruct((b, c), x.dtype),
            grid_spec=pltpu.PrefetchScalarGridSpec(
                num_scalar_prefetch=0,
                grid=(pl.cdiv(b, tb),),
                in_specs=[
                    pl.BlockSpec((1, c), lambda bi: (0, 0)),     # weights, resident
                    pl.BlockSpec((tb, c), lambda bi: (bi, 0)),
                ],
                out_specs=pl.BlockSpec((tb, c), lambda bi: (bi, 0)),
            ),
            compiler_params=pltpu.CompilerParams(
                dimension_semantics=("parallel",),
                vmem_limit_bytes=32 * 1024 * 1024,
            ),
            cost_estimate=cost,
        )(w2, x2)
    else:
        # General case: sublane-axis reduction on a (B, C, M) view.
        x3 = x.reshape(b, c, m)
        w2 = w_vals.reshape(c, 1)
        tb, tm = _pick_tiles_sublane(b, c, m)
        out = pl.pallas_call(
            _wls_kernel_sublane,
            out_shape=jax.ShapeDtypeStruct((b, c, m), x.dtype),
            grid_spec=pltpu.PrefetchScalarGridSpec(
                num_scalar_prefetch=0,
                grid=(pl.cdiv(b, tb), pl.cdiv(m, tm)),
                in_specs=[
                    pl.BlockSpec((c, 1), lambda bi, mi: (0, 0)),  # weights, resident
                    pl.BlockSpec((tb, c, tm), lambda bi, mi: (bi, 0, mi)),
                ],
                out_specs=pl.BlockSpec((tb, c, tm), lambda bi, mi: (bi, 0, mi)),
            ),
            compiler_params=pltpu.CompilerParams(
                dimension_semantics=("parallel", "parallel"),
                vmem_limit_bytes=32 * 1024 * 1024,
            ),
            cost_estimate=cost,
        )(w2, x3)

    return out.reshape(x.shape)


def _reference(x, weights, dim):
    c = x.shape[dim]
    wshape = [1] * x.ndim
    wshape[dim] = c
    w = jnp.asarray(weights, jnp.float32).reshape(wshape)
    offset = jnp.sum(x, axis=dim, keepdims=True) / c
    clamped = jnp.clip(x + w - offset, 0.0, 1.0)
    norm = jnp.sqrt(jnp.sum(clamped * clamped, axis=dim, keepdims=True))
    return clamped / norm


if __name__ == "__main__":
    key = jax.random.PRNGKey(0)
    # NCHW input, softnorm over channels (dim=1)
    N, C, H, W = 2, 4, 16, 16
    x = jax.random.normal(key, (N, C, H, W), dtype=jnp.float32)

    # Deterministic weights in [0,1] summing to 1 (module default would be 1/C).
    weights = jnp.arange(1, C + 1, dtype=jnp.float32)
    weights = weights / jnp.sum(weights)

    out = weighted_linear_softnorm_pallas(x, weights, dim=1)
    out = jax.block_until_ready(out)
    ref = _reference(x, weights, dim=1)
    assert out.shape == x.shape
    assert jnp.allclose(out, ref, atol=1e-5, rtol=1e-5), "mismatch vs reference (explicit weights)"

    # Default uniform-weights path (weights=None -> 1/C each).
    out_u = jax.block_until_ready(weighted_linear_softnorm_pallas(x, dim=1))
    ref_u = _reference(x, jnp.full((C,), 1.0 / C, dtype=jnp.float32), dim=1)
    assert jnp.allclose(out_u, ref_u, atol=1e-5, rtol=1e-5), "mismatch vs reference (uniform weights)"

    # Innermost-dim path (lane-axis reduction), dim=3 over W.
    w_last = jnp.full((W,), 1.0 / W, dtype=jnp.float32)
    out_l = jax.block_until_ready(weighted_linear_softnorm_pallas(x, w_last, dim=3))
    ref_l = _reference(x, w_last, dim=3)
    assert jnp.allclose(out_l, ref_l, atol=1e-5, rtol=1e-5), "mismatch vs reference (dim=-1 path)"

    print("KERNEL_OK")
</pallas_src>

<mosaic_0001>
module attributes {stable_mosaic.version = 11 : i64} {
  func.func @_wls_kernel_sublane(%arg0: i32, %arg1: i32, %arg2: memref<4x1xf32, #tpu.memory_space<vmem>>, %arg3: memref<2x4x256xf32, #tpu.memory_space<vmem>>, %arg4: memref<2x4x256xf32, #tpu.memory_space<vmem>>) attributes {dimension_semantics = [#tpu.dimension_semantics<parallel>, #tpu.dimension_semantics<parallel>], iteration_bounds = array<i64: 1, 1>, scalar_prefetch = 0 : i64, scratch_operands = 0 : i64, tpu.core_type = #tpu.core_type<tc>, window_params = [{pipeline_mode = #tpu.pipeline_mode<synchronous>, transform_indices = @transform_0, window_bounds = array<i64: 4, 1>}, {transform_indices = @transform_1, window_bounds = array<i64: 2, 4, 256>}, {transform_indices = @transform_2, window_bounds = array<i64: 2, 4, 256>}]} {
    %c0 = arith.constant 0 : index
    %c0_0 = arith.constant 0 : index
    %c0_1 = arith.constant 0 : index
    %0 = vector.load %arg3[%c0, %c0_0, %c0_1] : memref<2x4x256xf32, #tpu.memory_space<vmem>>, vector<2x4x256xf32>
    %c0_2 = arith.constant 0 : index
    %c0_3 = arith.constant 0 : index
    %1 = vector.load %arg2[%c0_2, %c0_3] : memref<4x1xf32, #tpu.memory_space<vmem>>, vector<4x1xf32>
    %cst = arith.constant dense<0.000000e+00> : vector<2x256xf32>
    %2 = vector.multi_reduction <add>, %0, %cst [1] : vector<2x4x256xf32> to vector<2x256xf32>
    %3 = vector.shape_cast %2 : vector<2x256xf32> to vector<2x1x256xf32>
    %cst_4 = arith.constant 2.500000e-01 : f32
    %4 = vector.broadcast %cst_4 : f32 to vector<2x1x256xf32>
    %5 = arith.mulf %3, %4 : vector<2x1x256xf32>
    %6 = vector.shape_cast %1 : vector<4x1xf32> to vector<1x4x1xf32>
    %7 = vector.broadcast %6 : vector<1x4x1xf32> to vector<2x4x256xf32>
    %8 = arith.addf %0, %7 : vector<2x4x256xf32>
    %9 = vector.broadcast %5 : vector<2x1x256xf32> to vector<2x4x256xf32>
    %10 = arith.subf %8, %9 : vector<2x4x256xf32>
    %cst_5 = arith.constant 0.000000e+00 : f32
    %cst_6 = arith.constant 1.000000e+00 : f32
    %11 = vector.broadcast %cst_5 : f32 to vector<2x4x256xf32>
    %12 = arith.maximumf %11, %10 : vector<2x4x256xf32>
    %13 = vector.broadcast %cst_6 : f32 to vector<2x4x256xf32>
    %14 = arith.minimumf %13, %12 : vector<2x4x256xf32>
    %15 = arith.mulf %14, %14 : vector<2x4x256xf32>
    %cst_7 = arith.constant dense<0.000000e+00> : vector<2x256xf32>
    %16 = vector.multi_reduction <add>, %15, %cst_7 [1] : vector<2x4x256xf32> to vector<2x256xf32>
    %17 = vector.shape_cast %16 : vector<2x256xf32> to vector<2x1x256xf32>
    %18 = math.rsqrt %17 : vector<2x1x256xf32>
    %19 = vector.broadcast %18 : vector<2x1x256xf32> to vector<2x4x256xf32>
    %20 = arith.mulf %14, %19 : vector<2x4x256xf32>
    %c0_8 = arith.constant 0 : index
    %c0_9 = arith.constant 0 : index
    %c0_10 = arith.constant 0 : index
    %21 = vector.load %arg4[%c0_8, %c0_9, %c0_10] : memref<2x4x256xf32, #tpu.memory_space<vmem>>, vector<2x4x256xf32>
    tpu.vector_store %arg4[%c0_8, %c0_9, %c0_10], %20 {strides = array<i32>} : memref<2x4x256xf32, #tpu.memory_space<vmem>>, vector<2x4x256xf32>,
    return
  }
  func.func @transform_0(%arg0: i32, %arg1: i32) -> (i32, i32) {
    %c0_i32 = arith.constant 0 : i32
    %c0_i32_0 = arith.constant 0 : i32
    %c0_i32_1 = arith.constant 0 : i32
    return %c0_i32, %c0_i32_0 : i32, i32
  }
  func.func @transform_1(%arg0: i32, %arg1: i32) -> (i32, i32, i32) {
    %c0_i32 = arith.constant 0 : i32
    %c0_i32_0 = arith.constant 0 : i32
    return %arg0, %c0_i32, %arg1 : i32, i32, i32
  }
  func.func @transform_2(%arg0: i32, %arg1: i32) -> (i32, i32, i32) {
    %c0_i32 = arith.constant 0 : i32
    %c0_i32_0 = arith.constant 0 : i32
    return %arg0, %c0_i32, %arg1 : i32, i32, i32
  }
}

</mosaic_0001>

<llo_original>
// kernel: weighted_linear_softnorm_pallas.1
$region0: #{weighted_linear_softnorm_pallas.1}
  #allocation0 [shape = 'u32[]', space=smem, size = 0x4, offset = 0x4, fixed_abs, tag = 'smem constant byte address 0x4 - core index']
  #allocation1 [shape = 'u32[144,128]{1,0:T(1,128)}', space=vmem, size = 0x12000, scoped, tag = 'internal scratch']
  %s0 = inlined_call_operand.vmem [shape: f32[4,1], index: 0, kind: input, shape index: {}]
  %s1 = inlined_call_operand.vmem [shape: f32[2,4,256], index: 1, kind: input, shape index: {}]
  %s2 = inlined_call_operand.vmem [shape: f32[2,4,256], index: 2, kind: output, shape index: {}]
  %s3 = sld [smem:[#allocation0]]
  $region18: #{weighted_linear_softnorm_pallas.1} parent=0
    _
  %s5 = ssub.s32 1, %s3
  %s6 = scalar_select 0, %s5, %s3
  // Predicated region
  $region2: #{weighted_linear_softnorm_pallas.1} parent=0 // pred_check
    _
  $region3: #{weighted_linear_softnorm_pallas.1} parent=0 // pred_check_branch
    %8 = sbr.rel (0) target = $region5
  $region4: #{weighted_linear_softnorm_pallas.1} parent=0 // pred_region
    _
  $region5: #{weighted_linear_softnorm_pallas.1} parent=0 // pred_fallthru
    _
  // Predicated region
  $region6: #{weighted_linear_softnorm_pallas.1} parent=0 // pred_check
    _
  $region7: #{weighted_linear_softnorm_pallas.1} parent=0 // pred_check_branch
    %10 = sbr.rel (0) target = $region9
  $region8: #{weighted_linear_softnorm_pallas.1} parent=0 // pred_region
    _
  $region9: #{weighted_linear_softnorm_pallas.1} parent=0 // pred_fallthru
    _
  %v11 = vld [vmem:[%s1] sm:$0xff]
  %v12 = vld [vmem:[%s1 + $0x8] sm:$0xff]
  %v13 = vld [vmem:[%s0] sm:$0xf]
  %v16 = vcombine.high %v11, %v11
  %v17 = vcombine.high %v12, %v12
  %vm20 = vcmask 1043456
  %v21 = vsel %vm20, %v11, 0.0
  %v22 = vrot.slane %v21, 4
  %v23 = vadd.f32 %v21, %v22
  %v24 = vrot.slane %v23, 2
  %v25 = vadd.f32 %v23, %v24
  %v26 = vrot.slane %v25, 1
  %v27 = vadd.f32 %v25, %v26
  %v28 = vsel %vm20, %v16, 0.0
  %v29 = vrot.slane %v28, 4
  %v30 = vadd.f32 %v28, %v29
  %v31 = vrot.slane %v30, 2
  %v32 = vadd.f32 %v30, %v31
  %v33 = vrot.slane %v32, 1
  %v34 = vadd.f32 %v32, %v33
  %v35 = vsel %vm20, %v12, 0.0
  %v36 = vrot.slane %v35, 4
  %v37 = vadd.f32 %v35, %v36
  %v38 = vrot.slane %v37, 2
  %v39 = vadd.f32 %v37, %v38
  %v40 = vrot.slane %v39, 1
  %v41 = vadd.f32 %v39, %v40
  %v42 = vsel %vm20, %v17, 0.0
  %v43 = vrot.slane %v42, 4
  %v44 = vadd.f32 %v42, %v43
  %v45 = vrot.slane %v44, 2
  %v46 = vadd.f32 %v44, %v45
  %v47 = vrot.slane %v46, 1
  %v48 = vadd.f32 %v46, %v47
  %v49 = vmul.f32 %v27, 0.25
  %v50 = vmul.f32 %v34, 0.25
  %v51 = vmul.f32 %v41, 0.25
  %v52 = vmul.f32 %v48, 0.25
  %54 = vset.pattern.permute.xlu0 0
  %55 = vperm.xlu0 %54, %v13
  %v56 = vpop.permute.xlu0 %55
  %v58 = vunpack.c.l.s4 839922192
  %v59 = vunpack.c.0.s8 %v58
  %v60 = vlaneseq
  %v61 = vshrl.u32 %v60, 7
  %v62 = vsub.s32 %v59, %v61
  %v63 = vrot.slane %v56, %v62
  %v65 = vadd.f32 %v11, %v63
  %v66 = vadd.f32 %v12, %v63
  %v71 = vcombine.low %v49, %v50
  %v72 = vcombine.low %v51, %v52
  %v75 = vsub.f32 %v65, %v71
  %v76 = vsub.f32 %v66, %v72
  %v77 = vmax.f32 %v75, 0.0
  %v78 = vmax.f32 %v76, 0.0
  %v79 = vmin.f32 %v77, 1.0
  %v80 = vmin.f32 %v78, 1.0
  %v81 = vmul.f32 %v79, %v79
  %v82 = vmul.f32 %v80, %v80
  %v85 = vcombine.high %v81, %v81
  %v86 = vcombine.high %v82, %v82
  %v89 = vsel %vm20, %v81, 0.0
  %v90 = vrot.slane %v89, 4
  %v91 = vadd.f32 %v89, %v90
  %v92 = vrot.slane %v91, 2
  %v93 = vadd.f32 %v91, %v92
  %v94 = vrot.slane %v93, 1
  %v95 = vadd.f32 %v93, %v94
  %v96 = vsel %vm20, %v85, 0.0
  %v97 = vrot.slane %v96, 4
  %v98 = vadd.f32 %v96, %v97
  %v99 = vrot.slane %v98, 2
  %v100 = vadd.f32 %v98, %v99
  %v101 = vrot.slane %v100, 1
  %v102 = vadd.f32 %v100, %v101
  %v103 = vsel %vm20, %v82, 0.0
  %v104 = vrot.slane %v103, 4
  %v105 = vadd.f32 %v103, %v104
  %v106 = vrot.slane %v105, 2
  %v107 = vadd.f32 %v105, %v106
  %v108 = vrot.slane %v107, 1
  %v109 = vadd.f32 %v107, %v108
  %v110 = vsel %vm20, %v86, 0.0
  %v111 = vrot.slane %v110, 4
  %v112 = vadd.f32 %v110, %v111
  %v113 = vrot.slane %v112, 2
  %v114 = vadd.f32 %v112, %v113
  %v115 = vrot.slane %v114, 1
  %v116 = vadd.f32 %v114, %v115
  %v117 = vrsqrt.pop %v95
  %v118 = vrsqrt.pop %v102
  %v119 = vrsqrt.pop %v109
  %v120 = vrsqrt.pop %v116
  %v125 = vcombine.low %v117, %v118
  %v126 = vcombine.low %v119, %v120
  %v129 = vmul.f32 %v79, %v125
  %v130 = vmul.f32 %v80, %v126
  %131 = vst [vmem:[%s2] sm:$0xff] %v129
  %132 = vst [vmem:[%s2 + $0x8] sm:$0xff] %v130
  // Predicated region
  $region10: #{weighted_linear_softnorm_pallas.1} parent=0 // pred_check
    _
  $region11: #{weighted_linear_softnorm_pallas.1} parent=0 // pred_check_branch
    %134 = sbr.rel (0) target = $region13
  $region12: #{weighted_linear_softnorm_pallas.1} parent=0 // pred_region
    _
  $region13: #{weighted_linear_softnorm_pallas.1} parent=0 // pred_fallthru
    _
  // Predicated region
  $region14: #{weighted_linear_softnorm_pallas.1} parent=0 // pred_check
    _
  $region15: #{weighted_linear_softnorm_pallas.1} parent=0 // pred_check_branch
    %136 = sbr.rel (0) target = $region17
  $region16: #{weighted_linear_softnorm_pallas.1} parent=0 // pred_region
    _
  $region17: #{weighted_linear_softnorm_pallas.1} parent=0 // pred_fallthru
    _

</llo_original>
